<compile_context>
chip_gen: v7x
topology: tpu7x:2x2x1
jax: 0.10.0
libtpu: 0.0.40
codegen_flags: <defaults>
</compile_context>

<pallas_src>
import functools

import jax
import jax.numpy as jnp
from jax import lax
from jax.experimental import pallas as pl
from jax.experimental.pallas import tpu as pltpu

LANE = 128
MAX_TILE_R = 8192   # 8192 rows x 128 lanes x 4 B = 4 MiB per f32 input tile
CHUNK_R = 512       # rows folded into the accumulator per inner-loop step


def _contrast_loss_kernel(b_ref, d_ref, y_ref, out_ref, acc_ref, *,
                          margin, chunk_r, n_chunks):
    # b_ref:   (1,) int32 in SMEM  -- true element count B (scalar prefetch)
    # d_ref:   (tile_r, 128) distances (native dtype, cast in-kernel)
    # y_ref:   (tile_r, 128) labels   (native dtype, cast in-kernel)
    # out_ref: (1, 1) f32 in SMEM  -- the mean loss (written on last step)
    # acc_ref: (8, 128) f32 VMEM accumulator, resident across the grid axis.
    i = pl.program_id(0)
    b = b_ref[0]

    @pl.when(i == 0)
    def _init():
        acc_ref[...] = jnp.zeros_like(acc_ref)

    # Constant per-chunk element index, hoisted out of the chunk loop:
    # element (r, l) of a chunk has flat index r * 128 + l.
    local_idx = (lax.broadcasted_iota(jnp.int32, (chunk_r, LANE), 0) * LANE
                 + lax.broadcasted_iota(jnp.int32, (chunk_r, LANE), 1))
    tile_elem0 = i * (n_chunks * chunk_r * LANE)

    def body(c, acc):
        r0 = pl.multiple_of(c * chunk_r, chunk_r)
        d = d_ref[pl.ds(r0, chunk_r), :].astype(jnp.float32)
        y = y_ref[pl.ds(r0, chunk_r), :].astype(jnp.float32)
        hinge = jnp.maximum(jnp.float32(margin) - d, 0.0)
        loss = 0.5 * (y * d * d + (1.0 - y) * hinge * hinge)
        # Mask ragged tail / boundary-block padding (unspecified data) so it
        # contributes exactly zero.
        idx = local_idx + (tile_elem0 + c * (chunk_r * LANE))
        loss = jnp.where(idx < b, loss, 0.0)
        # (chunk_r, 128) -> (8, 128): pure VPU adds across vregs, no XLU.
        return acc + loss.reshape(-1, 8, LANE).sum(axis=0)

    acc_ref[...] = lax.fori_loop(0, n_chunks, body, acc_ref[...])

    @pl.when(i == pl.num_programs(0) - 1)
    def _finalize():
        # Single cross-lane reduce + exact divide by the true B.
        out_ref[0, 0] = jnp.sum(acc_ref[...]) / b.astype(jnp.float32)


def contrast_loss(D, y, *, margin=2.0):
    """Contrastive loss. D, y: 1-D arrays of equal length B (any B >= 1)."""
    assert D.shape == y.shape and D.ndim == 1
    B = D.shape[0]

    rows = pl.cdiv(B, LANE)
    pad = rows * LANE - B
    if pad:
        # Only needed for the free-of-charge reshape below when B % 128 != 0;
        # padded values are masked in-kernel, so any fill value is fine.
        # TODO(synk): stream 1-D directly to avoid this O(B) pad copy.
        D = jnp.pad(D, (0, pad))
        y = jnp.pad(y, (0, pad))
    d2 = D.reshape(rows, LANE)
    y2 = y.reshape(rows, LANE)

    # ---- tiling: biggest step that fits comfortably in scoped VMEM ----------
    if rows <= CHUNK_R:
        chunk_r = max(8, ((rows + 7) // 8) * 8)   # single chunk, rows%8 -> 8
        tile_r = chunk_r
    else:
        chunk_r = CHUNK_R
        tile_r = min(MAX_TILE_R, pl.cdiv(rows, CHUNK_R) * CHUNK_R)
    n_chunks = tile_r // chunk_r
    num_tiles = pl.cdiv(rows, tile_r)

    kernel = functools.partial(
        _contrast_loss_kernel,
        margin=float(margin), chunk_r=chunk_r, n_chunks=n_chunks,
    )

    b_arr = jnp.array([B], dtype=jnp.int32)
    bytes_in = d2.size * d2.dtype.itemsize + y2.size * y2.dtype.itemsize

    out = pl.pallas_call(
        kernel,
        out_shape=jax.ShapeDtypeStruct((1, 1), jnp.float32),
        grid_spec=pltpu.PrefetchScalarGridSpec(
            num_scalar_prefetch=1,
            grid=(num_tiles,),
            in_specs=[
                pl.BlockSpec((tile_r, LANE), lambda i, b: (i, 0)),
                pl.BlockSpec((tile_r, LANE), lambda i, b: (i, 0)),
            ],
            out_specs=pl.BlockSpec(
                (1, 1), lambda i, b: (0, 0), memory_space=pltpu.SMEM
            ),
            scratch_shapes=[pltpu.VMEM((8, LANE), jnp.float32)],
        ),
        compiler_params=pltpu.CompilerParams(
            dimension_semantics=("arbitrary",),
            vmem_limit_bytes=32 * 1024 * 1024,
        ),
        cost_estimate=pl.CostEstimate(
            flops=9 * rows * LANE,
            transcendentals=0,
            bytes_accessed=bytes_in + 4,
        ),
    )(b_arr, d2, y2)

    return out[0, 0]


def _reference(D, y, margin=2.0):
    d = D.astype(jnp.float32)
    loss = (0.5 * y * d ** 2
            + (1.0 - y) * 0.5 * jnp.maximum(margin - d, 0.0) ** 2)
    return jnp.mean(loss)


if __name__ == "__main__":
    key = jax.random.PRNGKey(0)

    ok = True
    for B in (256, 200):  # multiple of 128, and a ragged size exercising masking
        k1, k2 = jax.random.split(jax.random.fold_in(key, B))
        # D: non-negative Euclidean distances; y: binary labels {0, 1}
        D = jnp.abs(jax.random.normal(k1, (B,), dtype=jnp.float32)) * 2.0
        y = jax.random.bernoulli(k2, 0.5, (B,)).astype(jnp.float32)

        out = jax.block_until_ready(contrast_loss(D, y))
        ref = _reference(D, y)
        if not jnp.allclose(out, ref, rtol=1e-4, atol=1e-5):
            ok = False
            print("MISMATCH", B, out, ref)

    if ok:
        print("KERNEL_OK")
</pallas_src>

<mosaic_0001>
module attributes {stable_mosaic.version = 11 : i64} {
  func.func @_contrast_loss_kernel(%arg0: i32, %arg1: memref<1xi32, #tpu.memory_space<smem>>, %arg2: memref<8x128xf32, #tpu.memory_space<vmem>>, %arg3: memref<8x128xf32, #tpu.memory_space<vmem>>, %arg4: memref<1x1xf32, #tpu.memory_space<smem>>, %arg5: memref<8x128xf32, #tpu.memory_space<vmem>>) attributes {dimension_semantics = [#tpu.dimension_semantics<arbitrary>], iteration_bounds = array<i64: 1>, scalar_prefetch = 1 : i64, scratch_operands = 1 : i64, tpu.core_type = #tpu.core_type<tc>, window_params = [{transform_indices = @transform_0, window_bounds = array<i64: 8, 128>}, {transform_indices = @transform_1, window_bounds = array<i64: 8, 128>}, {transform_indices = @transform_2, window_bounds = array<i64: 1, 1>}]} {
    %c0 = arith.constant 0 : index
    %0 = memref.load %arg1[%c0] : memref<1xi32, #tpu.memory_space<smem>>
    %c0_i32 = arith.constant 0 : i32
    %1 = arith.cmpi eq, %arg0, %c0_i32 : i32
    %2 = arith.extui %1 : i1 to i32
    %c0_i32_0 = arith.constant 0 : i32
    %3 = arith.cmpi ne, %2, %c0_i32_0 : i32
    scf.if %3 {
      %cst_16 = arith.constant 0.000000e+00 : f32
      %45 = vector.broadcast %cst_16 : f32 to vector<8x128xf32>
      %c0_17 = arith.constant 0 : index
      %c0_18 = arith.constant 0 : index
      %46 = vector.load %arg5[%c0_17, %c0_18] : memref<8x128xf32, #tpu.memory_space<vmem>>, vector<8x128xf32>
      tpu.vector_store %arg5[%c0_17, %c0_18], %45 {strides = array<i32>} : memref<8x128xf32, #tpu.memory_space<vmem>>, vector<8x128xf32>,
    } else {
    }
    %4 = tpu.iota {dimensions = array<i32: 0>} : vector<8x128xi32>
    %c128_i32 = arith.constant 128 : i32
    %5 = vector.broadcast %c128_i32 : i32 to vector<8x128xi32>
    %6 = arith.muli %4, %5 : vector<8x128xi32>
    %7 = tpu.iota {dimensions = array<i32: 1>} : vector<8x128xi32>
    %8 = arith.addi %6, %7 : vector<8x128xi32>
    %c1024_i32 = arith.constant 1024 : i32
    %9 = arith.muli %arg0, %c1024_i32 : i32
    %c0_1 = arith.constant 0 : index
    %c0_2 = arith.constant 0 : index
    %10 = vector.load %arg5[%c0_1, %c0_2] : memref<8x128xf32, #tpu.memory_space<vmem>>, vector<8x128xf32>
    %c0_i32_3 = arith.constant 0 : i32
    %c8_i32 = arith.constant 8 : i32
    %11 = arith.muli %c0_i32_3, %c8_i32 : i32
    %12 = tpu.assume_multiple %11, 8 : i32
    %13 = arith.index_cast %12 : i32 to index
    %c0_4 = arith.constant 0 : index
    %14 = vector.load %arg2[%13, %c0_4] : memref<8x128xf32, #tpu.memory_space<vmem>>, vector<8x128xf32>
    %15 = arith.index_cast %12 : i32 to index
    %c0_5 = arith.constant 0 : index
    %16 = vector.load %arg3[%15, %c0_5] : memref<8x128xf32, #tpu.memory_space<vmem>>, vector<8x128xf32>
    %cst = arith.constant 2.000000e+00 : f32
    %17 = vector.broadcast %cst : f32 to vector<8x128xf32>
    %18 = arith.subf %17, %14 : vector<8x128xf32>
    %cst_6 = arith.constant 0.000000e+00 : f32
    %19 = vector.broadcast %cst_6 : f32 to vector<8x128xf32>
    %20 = arith.maximumf %18, %19 : vector<8x128xf32>
    %21 = arith.mulf %16, %14 : vector<8x128xf32>
    %22 = arith.mulf %21, %14 : vector<8x128xf32>
    %cst_7 = arith.constant 1.000000e+00 : f32
    %23 = vector.broadcast %cst_7 : f32 to vector<8x128xf32>
    %24 = arith.subf %23, %16 : vector<8x128xf32>
    %25 = arith.mulf %24, %20 : vector<8x128xf32>
    %26 = arith.mulf %25, %20 : vector<8x128xf32>
    %27 = arith.addf %22, %26 : vector<8x128xf32>
    %cst_8 = arith.constant 5.000000e-01 : f32
    %28 = vector.broadcast %cst_8 : f32 to vector<8x128xf32>
    %29 = arith.mulf %28, %27 : vector<8x128xf32>
    %c1024_i32_9 = arith.constant 1024 : i32
    %30 = arith.muli %c0_i32_3, %c1024_i32_9 : i32
    %31 = arith.addi %9, %30 : i32
    %32 = vector.broadcast %31 : i32 to vector<8x128xi32>
    %33 = arith.addi %8, %32 : vector<8x128xi32>
    %34 = vector.broadcast %0 : i32 to vector<8x128xi32>
    %35 = arith.cmpi slt, %33, %34 : vector<8x128xi32>
    %cst_10 = arith.constant 0.000000e+00 : f32
    %36 = vector.broadcast %cst_10 : f32 to vector<8x128xf32>
    %37 = arith.select %35, %29, %36 : vector<8x128xi1>, vector<8x128xf32>
    %38 = vector.shape_cast %37 : vector<8x128xf32> to vector<1x8x128xf32>
    %cst_11 = arith.constant dense<0.000000e+00> : vector<8x128xf32>
    %39 = vector.multi_reduction <add>, %38, %cst_11 [0] : vector<1x8x128xf32> to vector<8x128xf32>
    %40 = arith.addf %10, %39 : vector<8x128xf32>
    %c1_i32 = arith.constant 1 : i32
    %c0_12 = arith.constant 0 : index
    %c0_13 = arith.constant 0 : index
    %41 = vector.load %arg5[%c0_12, %c0_13] : memref<8x128xf32, #tpu.memory_space<vmem>>, vector<8x128xf32>
    tpu.vector_store %arg5[%c0_12, %c0_13], %40 {strides = array<i32>} : memref<8x128xf32, #tpu.memory_space<vmem>>, vector<8x128xf32>,
    %c0_i32_14 = arith.constant 0 : i32
    %42 = arith.cmpi eq, %arg0, %c0_i32_14 : i32
    %43 = arith.extui %42 : i1 to i32
    %c0_i32_15 = arith.constant 0 : i32
    %44 = arith.cmpi ne, %43, %c0_i32_15 : i32
    scf.if %44 {
      %c0_16 = arith.constant 0 : index
      %c0_17 = arith.constant 0 : index
      %45 = vector.load %arg5[%c0_16, %c0_17] : memref<8x128xf32, #tpu.memory_space<vmem>>, vector<8x128xf32>
      %46 = vector.shape_cast %45 : vector<8x128xf32> to vector<1x8x128xf32>
      %cst_18 = arith.constant dense<0.000000e+00> : vector<1xf32>
      %47 = vector.multi_reduction <add>, %46, %cst_18 [1, 2] : vector<1x8x128xf32> to vector<1xf32>
      %48 = vector.shape_cast %47 : vector<1xf32> to vector<1x1x1xf32>
      %49 = vector.extract %48[0, 0, 0] : f32 from vector<1x1x1xf32>
      %50 = arith.sitofp %0 : i32 to f32
      %51 = arith.divf %49, %50 : f32
      %c0_19 = arith.constant 0 : index
      %c0_20 = arith.constant 0 : index
      %52 = memref.load %arg4[%c0_19, %c0_20] : memref<1x1xf32, #tpu.memory_space<smem>>
      memref.store %51, %arg4[%c0_19, %c0_20] : memref<1x1xf32, #tpu.memory_space<smem>>
    } else {
    }
    return
  }
  func.func @transform_0(%arg0: i32, %arg1: memref<1xi32, #tpu.memory_space<smem>>) -> (i32, i32) {
    %c0_i32 = arith.constant 0 : i32
    %c0_i32_0 = arith.constant 0 : i32
    return %arg0, %c0_i32 : i32, i32
  }
  func.func @transform_1(%arg0: i32, %arg1: memref<1xi32, #tpu.memory_space<smem>>) -> (i32, i32) {
    %c0_i32 = arith.constant 0 : i32
    %c0_i32_0 = arith.constant 0 : i32
    return %arg0, %c0_i32 : i32, i32
  }
  func.func @transform_2(%arg0: i32, %arg1: memref<1xi32, #tpu.memory_space<smem>>) -> (i32, i32) {
    %c0_i32 = arith.constant 0 : i32
    %c0_i32_0 = arith.constant 0 : i32
    %c0_i32_1 = arith.constant 0 : i32
    return %c0_i32, %c0_i32_0 : i32, i32
  }
}

</mosaic_0001>

<llo_original>
// kernel: tpu_custom_call.1
$region0: #{tpu_custom_call.1}
  #allocation0 [shape = 'u32[]', space=smem, size = 0x4, offset = 0x4, fixed_abs, tag = 'smem constant byte address 0x4 - core index']
  #allocation1 [shape = 'u32[144,128]{1,0:T(1,128)}', space=vmem, size = 0x12000, scoped, tag = 'internal scratch']
  #allocation2 [shape = 'f32[8,128]{1,0:T(8,128)}', space=vmem, size = 0x1000, scoped, tag = 'scratch operand']
  #allocation3 [shape = 's32[1]{0}', space=sflag, size = 0x4, scoped, tag = 'scoped memory for tpu_custom_call.1']
  #allocation4 [shape = 's32[1]{0:T(128)S(6)}', space=smem, size = 0x200, scoped, tag = 'prefetched SMEM operand 0']
  %s0 = inlined_call_operand.<no memory space> [shape: s32[1], index: 0, kind: input, shape index: {}]
  %s1 = inlined_call_operand.vmem [shape: f32[2,128], index: 1, kind: input, shape index: {}]
  %s2 = inlined_call_operand.vmem [shape: f32[2,128], index: 2, kind: input, shape index: {}]
  %s3 = inlined_call_operand.hbm [shape: f32[1,1], index: 3, kind: output, shape index: {}]
  %s4 = sld [smem:[#allocation0]]
  $region26: #{tpu_custom_call.1} parent=0
    _
  %s6 = ssub.s32 1, %s4
  %s7 = scalar_select 0, %s6, %s4
  %8 = sst [smem:[#allocation4]] %s0
  $region1: #{tpu_custom_call.1} parent=0
    #allocation5 [shape = 'u8[512]{0}', space=smem, size = 0x200, scoped, tag = 'output window, operand 0, single buffered']
    #allocation6 [shape = 's32[1]{0}', space=sflag, size = 0x4, scoped, tag = 'scoped memory for tpu_custom_call.1']
    %9 = vsyncpa [#allocation6], 0
    // Predicated region
    $region2: #{tpu_custom_call.1} parent=1 // pred_check
      _
    $region3: #{tpu_custom_call.1} parent=1 // pred_check_branch
      %11 = sbr.rel (0) target = $region5
    $region4: #{tpu_custom_call.1} parent=1 // pred_region
      _
    $region5: #{tpu_custom_call.1} parent=1 // pred_fallthru
      _
    // Predicated region
    $region6: #{tpu_custom_call.1} parent=1 // pred_check
      _
    $region7: #{tpu_custom_call.1} parent=1 // pred_check_branch
      %13 = sbr.rel (0) target = $region9
    $region8: #{tpu_custom_call.1} parent=1 // pred_region
      _
    $region9: #{tpu_custom_call.1} parent=1 // pred_fallthru
      _
    %s14 = sld [smem:[#allocation4]]
    %p15 = scmp.eq.s32.totalorder 0, 0
    // Predicated region
    $region10: #{tpu_custom_call.1} parent=1 // pred_check
      %p16 = pneg %p15
    $region11: #{tpu_custom_call.1} parent=1 // pred_check_branch
      %18 = sbr.rel (%p16) target = $region13
    $region12: #{tpu_custom_call.1} parent=1 // pred_region
      %19 = vst [vmem:[#allocation2] sm:$0xff] 0.0
    $region13: #{tpu_custom_call.1} parent=1 // pred_fallthru
      _
    %v20 = vlaneseq
    %v21 = vshrl.u32 %v20, 7
    %v22 = vmul.u32 %v21, 128
    %v23 = vlaneseq
    %v24 = vand.u32 %v23, 127
    %v25 = vadd.s32 %v22, %v24
    %s26 = smul.u32 0, 1024
    %v27 = vld [vmem:[#allocation2] sm:$0xff]
    %v28 = vld [vmem:[%s1] sm:$0xff]
    %v29 = vld [vmem:[%s2] sm:$0xff]
    %v30 = vsub.f32 2.0, %v28
    %v31 = vmax.f32 %v30, 0.0
    %v32 = vmul.f32 %v29, %v28
    %v33 = vmul.f32 %v32, %v28
    %v34 = vsub.f32 1.0, %v29
    %v35 = vmul.f32 %v34, %v31
    %v36 = vmul.f32 %v35, %v31
    %v37 = vadd.f32 %v33, %v36
    %v38 = vmul.f32 %v37, 0.5
    %v39 = vstv %s26
    %v40 = vadd.s32 %v25, %v39
    %v41 = vstv %s14
    %vm42 = vcmp.lt.s32.totalorder %v40, %v41
    %v43 = vsel %vm42, %v38, 0.0
    %v44 = vadd.f32 %v43, 0.0
    %v45 = vadd.f32 %v27, %v44
    %46 = vst [vmem:[#allocation2] sm:$0xff] %v45
    // Predicated region
    $region14: #{tpu_custom_call.1} parent=1 // pred_check
      %p47 = pneg %p15
    $region15: #{tpu_custom_call.1} parent=1 // pred_check_branch
      %49 = sbr.rel (%p47) target = $region17
    $region16: #{tpu_custom_call.1} parent=1 // pred_region
      %v50 = vld [vmem:[#allocation2] sm:$0xff]
      %51 = vadd.xlane.f32.xlu0 %v50
      %v52 = vpop.xlane.xlu0 %51
      %v53 = vrot.slane %v52, 4
      %v54 = vadd.f32 %v52, %v53
      %v55 = vrot.slane %v54, 2
      %v56 = vadd.f32 %v54, %v55
      %v57 = vrot.slane %v56, 1
      %v58 = vadd.f32 %v56, %v57
      %s59 = vtos %v58
      %s60 = scvt.s32.f32 %s14
      %v61 = vstv %s60
      %v62 = vrcp.pop %v61
      %s63 = vtos %v62
      %s64 = smul.f32 %s59, %s63
      %s65 = scalar_lea.smem [#allocation5], 0
      %66 = sst [smem:[%s65]] %s64
    $region17: #{tpu_custom_call.1} parent=1 // pred_fallthru
      _
    // Predicated region
    $region18: #{tpu_custom_call.1} parent=1 // pred_check
      _
    $region19: #{tpu_custom_call.1} parent=1 // pred_check_branch
      %68 = sbr.rel (0) target = $region21
    $region20: #{tpu_custom_call.1} parent=1 // pred_region
      %s70 = ssub.s32 16, 16
      %71 = vsyncadd [#allocation6], %s70
      %74 = dma.smem_to_hbm [#allocation5], 16, %s3, [#allocation6]
    $region21: #{tpu_custom_call.1} parent=1 // pred_fallthru
      _
    // Predicated region
    $region22: #{tpu_custom_call.1} parent=1 // pred_check
      _
    $region23: #{tpu_custom_call.1} parent=1 // pred_check_branch
      %76 = sbr.rel (0) target = $region25
    $region24: #{tpu_custom_call.1} parent=1 // pred_region
      %77 = dma.done [#allocation6], 16
    $region25: #{tpu_custom_call.1} parent=1 // pred_fallthru
      _
    %78 = sfence
    %79 = vsyncpa [#allocation6], 1

</llo_original>
